<compile_context>
chip_gen: v7x
topology: tpu7x:2x2x1
jax: 0.10.0
libtpu: 0.0.40
codegen_flags: <defaults>
</compile_context>

<pallas_src>
import jax
import jax.numpy as jnp
from jax.experimental import pallas as pl
from jax.experimental.pallas import tpu as pltpu


_LANE = 128      # last block dim multiple for unmasked stores / MXU alignment
_SUBLANE = 8     # second-to-last block dim multiple
_MAX_TM = 512    # batch tile
_MAX_TN = 512    # output-dim tile
_MAX_TK = 512    # reduction tile
# Worst case f32 VMEM: 2*(tm*tk) + 2*(tk*tn) + 2*(tm*tn) + acc(tm*tn)
#   = (2+2+3)*512*512*4B = 7 MiB  << 64 MiB (v7x per-TC VMEM)


def _round_up(x: int, m: int) -> int:
    return (x + m - 1) // m * m


def _maybe_pad(a: jax.Array, rows: int, cols: int) -> jax.Array:
    r, c = a.shape
    if r == rows and c == cols:
        return a
    return jnp.pad(a, ((0, rows - r), (0, cols - c)))


def _matmul_kernel(x_ref, w_ref, o_ref, acc_ref):
    # Accumulate partial products over the K grid axis in an f32 scratch;
    # write the output tile only on the last K step.
    @pl.when(pl.program_id(2) == 0)
    def _():
        acc_ref[...] = jnp.zeros_like(acc_ref)

    acc_ref[...] += jnp.dot(
        x_ref[...], w_ref[...], preferred_element_type=jnp.float32
    )

    @pl.when(pl.program_id(2) == pl.num_programs(2) - 1)
    def _():
        o_ref[...] = acc_ref[...].astype(o_ref.dtype)


def linear_regression_forward(x: jax.Array, params: jax.Array) -> jax.Array:
    """Pallas equivalent of `input_tensor @ self.params`."""
    batch, num_feats = x.shape
    num_feats_w, output_dim = params.shape
    assert num_feats == num_feats_w, "feature dims must match"

    # ---- Choose lane/sublane-aligned tile sizes, then pad (exact: zeros). ----
    m_aligned = _round_up(batch, _SUBLANE)
    k_aligned = _round_up(num_feats, _LANE)
    n_aligned = _round_up(output_dim, _LANE)

    tm = min(_MAX_TM, m_aligned)
    tk = min(_MAX_TK, k_aligned)
    tn = min(_MAX_TN, n_aligned)

    m_pad = _round_up(m_aligned, tm)
    k_pad = _round_up(k_aligned, tk)
    n_pad = _round_up(n_aligned, tn)

    x_p = _maybe_pad(x, m_pad, k_pad)
    w_p = _maybe_pad(params, k_pad, n_pad)

    grid = (m_pad // tm, n_pad // tn, k_pad // tk)

    out_itemsize = jnp.dtype(x.dtype).itemsize
    cost = pl.CostEstimate(
        flops=2 * m_pad * k_pad * n_pad,
        transcendentals=0,
        bytes_accessed=(x_p.size * x_p.dtype.itemsize
                        + w_p.size * w_p.dtype.itemsize
                        + m_pad * n_pad * out_itemsize),
    )

    out_p = pl.pallas_call(
        _matmul_kernel,
        out_shape=jax.ShapeDtypeStruct((m_pad, n_pad), x.dtype),
        grid_spec=pltpu.PrefetchScalarGridSpec(
            num_scalar_prefetch=0,
            grid=grid,
            in_specs=[
                pl.BlockSpec((tm, tk), lambda i, j, k: (i, k)),  # x tile
                pl.BlockSpec((tk, tn), lambda i, j, k: (k, j)),  # params tile
            ],
            out_specs=pl.BlockSpec((tm, tn), lambda i, j, k: (i, j)),
            scratch_shapes=[pltpu.VMEM((tm, tn), jnp.float32)],
        ),
        compiler_params=pltpu.CompilerParams(
            dimension_semantics=("parallel", "parallel", "arbitrary"),
        ),
        cost_estimate=cost,
    )(x_p, w_p)

    # Slice the zero padding back off.
    if m_pad == batch and n_pad == output_dim:
        return out_p
    return out_p[:batch, :output_dim]


if __name__ == "__main__":
    key = jax.random.PRNGKey(0)

    # Small shapes implied by the module: (batch, num_feats) @ (num_feats, output_dim)
    batch, num_feats, output_dim = 8, 32, 16
    kx, kw, kx2, kx3, kw3 = jax.random.split(key, 5)
    x = jax.random.normal(kx, (batch, num_feats), dtype=jnp.float32)
    params = jax.random.normal(kw, (num_feats, output_dim), dtype=jnp.float32)

    logits = linear_regression_forward(x, params)
    jax.block_until_ready(logits)
    ref = x @ params
    assert logits.shape == (batch, output_dim)
    assert jnp.allclose(logits, ref, atol=1e-5, rtol=1e-5)

    # Multi-tile batch grid + padding slice (batch > TILE_M, not tile-aligned).
    big_batch = 1000
    x_big = jax.random.normal(kx2, (big_batch, num_feats), dtype=jnp.float32)
    logits_big = linear_regression_forward(x_big, params)
    jax.block_until_ready(logits_big)
    ref_big = x_big @ params
    assert logits_big.shape == (big_batch, output_dim)
    assert jnp.allclose(logits_big, ref_big, atol=1e-5, rtol=1e-5)

    # Exercise the K-reduction grid axis (num_feats > TILE_K) and N tiling.
    wide_feats, wide_out = 1536, 640
    x_wide = jax.random.normal(kx3, (64, wide_feats), dtype=jnp.float32)
    w_wide = jax.random.normal(kw3, (wide_feats, wide_out), dtype=jnp.float32)
    logits_wide = linear_regression_forward(x_wide, w_wide)
    jax.block_until_ready(logits_wide)
    ref_wide = x_wide @ w_wide
    assert logits_wide.shape == (64, wide_out)
    assert jnp.allclose(logits_wide, ref_wide, atol=1e-3, rtol=1e-3)

    print("KERNEL_OK")
</pallas_src>

<mosaic_0001>
module attributes {stable_mosaic.version = 11 : i64} {
  func.func @_matmul_kernel(%arg0: i32, %arg1: i32, %arg2: i32, %arg3: memref<8x128xf32, #tpu.memory_space<vmem>>, %arg4: memref<128x128xf32, #tpu.memory_space<vmem>>, %arg5: memref<8x128xf32, #tpu.memory_space<vmem>>, %arg6: memref<8x128xf32, #tpu.memory_space<vmem>>) attributes {dimension_semantics = [#tpu.dimension_semantics<parallel>, #tpu.dimension_semantics<parallel>, #tpu.dimension_semantics<arbitrary>], iteration_bounds = array<i64: 1, 1, 1>, scalar_prefetch = 0 : i64, scratch_operands = 1 : i64, tpu.core_type = #tpu.core_type<tc>, window_params = [{transform_indices = @transform_0, window_bounds = array<i64: 8, 128>}, {transform_indices = @transform_1, window_bounds = array<i64: 128, 128>}, {transform_indices = @transform_2, window_bounds = array<i64: 8, 128>}]} {
    %c0_i32 = arith.constant 0 : i32
    %0 = arith.cmpi eq, %arg2, %c0_i32 : i32
    %1 = arith.extui %0 : i1 to i32
    %c0_i32_0 = arith.constant 0 : i32
    %2 = arith.cmpi ne, %1, %c0_i32_0 : i32
    scf.if %2 {
      %cst_10 = arith.constant 0.000000e+00 : f32
      %12 = vector.broadcast %cst_10 : f32 to vector<8x128xf32>
      %c0_11 = arith.constant 0 : index
      %c0_12 = arith.constant 0 : index
      %13 = vector.load %arg6[%c0_11, %c0_12] : memref<8x128xf32, #tpu.memory_space<vmem>>, vector<8x128xf32>
      tpu.vector_store %arg6[%c0_11, %c0_12], %12 {strides = array<i32>} : memref<8x128xf32, #tpu.memory_space<vmem>>, vector<8x128xf32>,
    } else {
    }
    %c0 = arith.constant 0 : index
    %c0_1 = arith.constant 0 : index
    %3 = vector.load %arg6[%c0, %c0_1] : memref<8x128xf32, #tpu.memory_space<vmem>>, vector<8x128xf32>
    %c0_2 = arith.constant 0 : index
    %c0_3 = arith.constant 0 : index
    %4 = vector.load %arg3[%c0_2, %c0_3] : memref<8x128xf32, #tpu.memory_space<vmem>>, vector<8x128xf32>
    %c0_4 = arith.constant 0 : index
    %c0_5 = arith.constant 0 : index
    %5 = vector.load %arg4[%c0_4, %c0_5] : memref<128x128xf32, #tpu.memory_space<vmem>>, vector<128x128xf32>
    %cst = arith.constant dense<0.000000e+00> : vector<8x128xf32>
    %6 = tpu.matmul %4, %5, %cst {dimension_numbers = #tpu.dot_dimension_numbers<[1], [0], [0], [1], [0, 0, 1, 1], [], []>} : vector<8x128xf32>, vector<128x128xf32>, vector<8x128xf32> -> vector<8x128xf32>
    %7 = arith.addf %3, %6 : vector<8x128xf32>
    %c0_6 = arith.constant 0 : index
    %c0_7 = arith.constant 0 : index
    %8 = vector.load %arg6[%c0_6, %c0_7] : memref<8x128xf32, #tpu.memory_space<vmem>>, vector<8x128xf32>
    tpu.vector_store %arg6[%c0_6, %c0_7], %7 {strides = array<i32>} : memref<8x128xf32, #tpu.memory_space<vmem>>, vector<8x128xf32>,
    %c0_i32_8 = arith.constant 0 : i32
    %9 = arith.cmpi eq, %arg2, %c0_i32_8 : i32
    %10 = arith.extui %9 : i1 to i32
    %c0_i32_9 = arith.constant 0 : i32
    %11 = arith.cmpi ne, %10, %c0_i32_9 : i32
    scf.if %11 {
      %c0_10 = arith.constant 0 : index
      %c0_11 = arith.constant 0 : index
      %12 = vector.load %arg6[%c0_10, %c0_11] : memref<8x128xf32, #tpu.memory_space<vmem>>, vector<8x128xf32>
      %c0_12 = arith.constant 0 : index
      %c0_13 = arith.constant 0 : index
      %13 = vector.load %arg5[%c0_12, %c0_13] : memref<8x128xf32, #tpu.memory_space<vmem>>, vector<8x128xf32>
      tpu.vector_store %arg5[%c0_12, %c0_13], %12 {strides = array<i32>} : memref<8x128xf32, #tpu.memory_space<vmem>>, vector<8x128xf32>,
    } else {
    }
    return
  }
  func.func @transform_0(%arg0: i32, %arg1: i32, %arg2: i32) -> (i32, i32) {
    %c0_i32 = arith.constant 0 : i32
    return %arg0, %arg2 : i32, i32
  }
  func.func @transform_1(%arg0: i32, %arg1: i32, %arg2: i32) -> (i32, i32) {
    %c0_i32 = arith.constant 0 : i32
    return %arg2, %arg1 : i32, i32
  }
  func.func @transform_2(%arg0: i32, %arg1: i32, %arg2: i32) -> (i32, i32) {
    %c0_i32 = arith.constant 0 : i32
    return %arg0, %arg1 : i32, i32
  }
}

</mosaic_0001>

<llo_original>
// kernel: tpu_custom_call.1
$region0: #{tpu_custom_call.1}
  #allocation0 [shape = 'u32[]', space=smem, size = 0x4, offset = 0x4, fixed_abs, tag = 'smem constant byte address 0x4 - core index']
  #allocation1 [shape = 'u32[144,128]{1,0:T(1,128)}', space=vmem, size = 0x12000, scoped, tag = 'internal scratch']
  #allocation2 [shape = 'f32[8,128]{1,0:T(8,128)}', space=vmem, size = 0x1000, scoped, tag = 'scratch operand']
  %s0 = inlined_call_operand.hbm [shape: f32[8,128], index: 0, kind: input, shape index: {}]
  %s1 = inlined_call_operand.hbm [shape: f32[128,128], index: 1, kind: input, shape index: {}]
  %s2 = inlined_call_operand.hbm [shape: f32[8,128], index: 2, kind: output, shape index: {}]
  %s3 = sld [smem:[#allocation0]]
  $region34: #{tpu_custom_call.1} parent=0
    _
  %s5 = ssub.s32 1, %s3
  %s6 = scalar_select 0, %s5, %s3
  $region1: #{tpu_custom_call.1} parent=0
    #allocation3 [shape = 'u8[4096]{0}', space=vmem, size = 0x1000, scoped, tag = 'input window, operand 0, single buffered']
    #allocation4 [shape = 's32[1]{0}', space=sflag, size = 0x4, scoped, tag = 'scoped memory for tpu_custom_call.1']
    #allocation5 [shape = 's32[1]{0}', space=sflag, size = 0x4, scoped, tag = 'scoped memory for tpu_custom_call.1']
    #allocation6 [shape = 'u8[65536]{0}', space=vmem, size = 0x10000, scoped, tag = 'input window, operand 1, single buffered']
    #allocation7 [shape = 's32[1]{0}', space=sflag, size = 0x4, scoped, tag = 'scoped memory for tpu_custom_call.1']
    #allocation8 [shape = 'u8[4096]{0}', space=vmem, size = 0x1000, scoped, tag = 'output window, operand 0, single buffered']
    %7 = vsyncpa [#allocation4], 0
    %8 = vsyncpa [#allocation7], 0
    %9 = vsyncpa [#allocation5], 0
    // Predicated region
    $region2: #{tpu_custom_call.1} parent=1 // pred_check
      _
    $region3: #{tpu_custom_call.1} parent=1 // pred_check_branch
      %11 = sbr.rel (0) target = $region5
    $region4: #{tpu_custom_call.1} parent=1 // pred_region
      %s13 = ssub.s32 128, 128
      %14 = vsyncadd [#allocation4], %s13
      %s16 = sshll.u32 [#allocation3], 4
      %s17 = int_to_ptr.vmem [resolvable:$true] %s16
      %19 = dma.hbm_to_vmem [thread:$0]  %s0, 128, %s17, [#allocation4]
    $region5: #{tpu_custom_call.1} parent=1 // pred_fallthru
      _
    // Predicated region
    $region6: #{tpu_custom_call.1} parent=1 // pred_check
      _
    $region7: #{tpu_custom_call.1} parent=1 // pred_check_branch
      %21 = sbr.rel (0) target = $region9
    $region8: #{tpu_custom_call.1} parent=1 // pred_region
      %s23 = ssub.s32 2048, 2048
      %24 = vsyncadd [#allocation7], %s23
      %s25 = sshll.u32 [#allocation6], 4
      %s26 = int_to_ptr.vmem [resolvable:$true] %s25
      %31 = dma.hbm_to_vmem [thread:$0]  %s1, 2048, %s26, [#allocation7], 128, 128, 8
    $region9: #{tpu_custom_call.1} parent=1 // pred_fallthru
      _
    // Predicated region
    $region10: #{tpu_custom_call.1} parent=1 // pred_check
      _
    $region11: #{tpu_custom_call.1} parent=1 // pred_check_branch
      %33 = sbr.rel (0) target = $region13
    $region12: #{tpu_custom_call.1} parent=1 // pred_region
      %34 = dma.done [#allocation4], 128
    $region13: #{tpu_custom_call.1} parent=1 // pred_fallthru
      _
    // Predicated region
    $region14: #{tpu_custom_call.1} parent=1 // pred_check
      _
    $region15: #{tpu_custom_call.1} parent=1 // pred_check_branch
      %36 = sbr.rel (0) target = $region17
    $region16: #{tpu_custom_call.1} parent=1 // pred_region
      %37 = dma.done [#allocation7], 2048
    $region17: #{tpu_custom_call.1} parent=1 // pred_fallthru
      _
    %p38 = scmp.eq.s32.totalorder 0, 0
    // Predicated region
    $region18: #{tpu_custom_call.1} parent=1 // pred_check
      %p39 = pneg %p38
    $region19: #{tpu_custom_call.1} parent=1 // pred_check_branch
      %41 = sbr.rel (%p39) target = $region21
    $region20: #{tpu_custom_call.1} parent=1 // pred_region
      %42 = vst [vmem:[#allocation2] sm:$0xff] 0.0
    $region21: #{tpu_custom_call.1} parent=1 // pred_fallthru
      _
    %v43 = vld [vmem:[#allocation2] sm:$0xff]
    %v44 = vld [vmem:[#allocation3] sm:$0xff]
    %v45 = vld [vmem:[#allocation6] sm:$0xff]
    %v46 = vld [vmem:[#allocation6 + $0x8] sm:$0xff]
    %v47 = vld [vmem:[#allocation6 + $0x10] sm:$0xff]
    %v48 = vld [vmem:[#allocation6 + $0x18] sm:$0xff]
    %v49 = vld [vmem:[#allocation6 + $0x20] sm:$0xff]
    %v50 = vld [vmem:[#allocation6 + $0x28] sm:$0xff]
    %v51 = vld [vmem:[#allocation6 + $0x30] sm:$0xff]
    %v52 = vld [vmem:[#allocation6 + $0x38] sm:$0xff]
    %v53 = vld [vmem:[#allocation6 + $0x40] sm:$0xff]
    %v54 = vld [vmem:[#allocation6 + $0x48] sm:$0xff]
    %v55 = vld [vmem:[#allocation6 + $0x50] sm:$0xff]
    %v56 = vld [vmem:[#allocation6 + $0x58] sm:$0xff]
    %v57 = vld [vmem:[#allocation6 + $0x60] sm:$0xff]
    %v58 = vld [vmem:[#allocation6 + $0x68] sm:$0xff]
    %v59 = vld [vmem:[#allocation6 + $0x70] sm:$0xff]
    %v60 = vld [vmem:[#allocation6 + $0x78] sm:$0xff]
    %61 = vmatprep.subr.mxu0 0.0
    %62 = vmatpush1.msra.mxu0 %v45
    %63 = vmatprep.subr.mxu0 0.0
    %64 = vmatpush1.msra.mxu0 %v46
    %65 = vmatprep.subr.mxu0 0.0
    %66 = vmatpush1.msra.mxu0 %v47
    %67 = vmatprep.subr.mxu0 0.0
    %68 = vmatpush1.msra.mxu0 %v48
    %69 = vmatprep.subr.mxu0 0.0
    %70 = vmatpush1.msra.mxu0 %v49
    %71 = vmatprep.subr.mxu0 0.0
    %72 = vmatpush1.msra.mxu0 %v50
    %73 = vmatprep.subr.mxu0 0.0
    %74 = vmatpush1.msra.mxu0 %v51
    %75 = vmatprep.subr.mxu0 0.0
    %76 = vmatpush1.msra.mxu0 %v52
    %77 = vmatprep.subr.mxu0 0.0
    %78 = vmatpush1.msra.mxu0 %v53
    %79 = vmatprep.subr.mxu0 0.0
    %80 = vmatpush1.msra.mxu0 %v54
    %81 = vmatprep.subr.mxu0 0.0
    %82 = vmatpush1.msra.mxu0 %v55
    %83 = vmatprep.subr.mxu0 0.0
    %84 = vmatpush1.msra.mxu0 %v56
    %85 = vmatprep.subr.mxu0 0.0
    %86 = vmatpush1.msra.mxu0 %v57
    %87 = vmatprep.subr.mxu0 0.0
    %88 = vmatpush1.msra.mxu0 %v58
    %89 = vmatprep.subr.mxu0 0.0
    %90 = vmatpush1.msra.mxu0 %v59
    %91 = vmatprep.subr.mxu0 0.0
    %92 = vmatpush1.msra.mxu0 %v60
    %93 = vmatprep.subr.mxu0 0.0
    %94 = vmatpush1.msra.mxu0 0.0
    %95 = vmatprep.subr.mxu0 0.0
    %96 = vmatpush1.msra.mxu0 0.0
    %97 = vmatprep.subr.mxu0 0.0
    %98 = vmatpush1.msra.mxu0 0.0
    %99 = vmatprep.subr.mxu0 0.0
    %100 = vmatpush1.msra.mxu0 0.0
    %101 = vmatprep.subr.mxu0 0.0
    %102 = vmatpush1.msra.mxu0 0.0
    %103 = vmatprep.subr.mxu0 0.0
    %104 = vmatpush1.msra.mxu0 0.0
    %105 = vmatprep.subr.mxu0 0.0
    %106 = vmatpush1.msra.mxu0 0.0
    %107 = vmatprep.subr.mxu0 0.0
    %108 = vmatpush1.msra.mxu0 0.0
    %109 = vmatprep.subr.mxu0 0.0
    %110 = vmatpush1.msra.mxu0 0.0
    %111 = vmatprep.subr.mxu0 0.0
    %112 = vmatpush1.msra.mxu0 0.0
    %113 = vmatprep.subr.mxu0 0.0
    %114 = vmatpush1.msra.mxu0 0.0
    %115 = vmatprep.subr.mxu0 0.0
    %116 = vmatpush1.msra.mxu0 0.0
    %117 = vmatprep.subr.mxu0 0.0
    %118 = vmatpush1.msra.mxu0 0.0
    %119 = vmatprep.subr.mxu0 0.0
    %120 = vmatpush1.msra.mxu0 0.0
    %121 = vmatprep.subr.mxu0 0.0
    %122 = vmatpush1.msra.mxu0 0.0
    %123 = vmatprep.subr.mxu0 0.0
    %124 = vmatpush1.msra.mxu0 0.0
    %125 = vmatprep.mubr.f32.mxu0 0.0
    %126 = vmatmul.mubr.f32.gmra.mrb[0].mxu0 %v44
    %v127 = vpop.f32.mrb[0].mxu0
    %v128 = vadd.f32 0.0, %v127
    %v129 = vpop.f32.mrb[0].mxu0
    %130 = vdwg.mxu0
    %v131 = vadd.f32 %v43, %v128
    %132 = vst [vmem:[#allocation2] sm:$0xff] %v131
    // Predicated region
    $region22: #{tpu_custom_call.1} parent=1 // pred_check
      %p133 = pneg %p38
    $region23: #{tpu_custom_call.1} parent=1 // pred_check_branch
      %135 = sbr.rel (%p133) target = $region25
    $region24: #{tpu_custom_call.1} parent=1 // pred_region
      %v136 = vld [vmem:[#allocation2] sm:$0xff]
      %137 = vst [vmem:[#allocation8] sm:$0xff] %v136
    $region25: #{tpu_custom_call.1} parent=1 // pred_fallthru
      _
    // Predicated region
    $region26: #{tpu_custom_call.1} parent=1 // pred_check
      _
    $region27: #{tpu_custom_call.1} parent=1 // pred_check_branch
      %139 = sbr.rel (0) target = $region29
    $region28: #{tpu_custom_call.1} parent=1 // pred_region
      %s141 = ssub.s32 128, 128
      %142 = vsyncadd [#allocation5], %s141
      %s144 = sshll.u32 [#allocation8], 4
      %s145 = int_to_ptr.vmem [resolvable:$true] %s144
      %147 = dma.vmem_to_hbm [thread:$0]  %s145, 128, %s2, [#allocation5]
    $region29: #{tpu_custom_call.1} parent=1 // pred_fallthru
      _
    // Predicated region
    $region30: #{tpu_custom_call.1} parent=1 // pred_check
      _
    $region31: #{tpu_custom_call.1} parent=1 // pred_check_branch
      %149 = sbr.rel (0) target = $region33
    $region32: #{tpu_custom_call.1} parent=1 // pred_region
      %150 = dma.done [#allocation5], 128
    $region33: #{tpu_custom_call.1} parent=1 // pred_fallthru
      _
    %151 = vsyncpa [#allocation4], 1
    %152 = vsyncpa [#allocation7], 1
    %153 = vsyncpa [#allocation5], 1

</llo_original>
